<compile_context>
chip_gen: v5e
topology: v5e:2x2
jax: 0.10.0
libtpu: 0.0.40
codegen_flags: <defaults>
</compile_context>

<pallas_src>
import functools

import jax
import jax.numpy as jnp
from jax.experimental import pallas as pl
from jax.experimental.pallas import tpu as pltpu

EPS = 1e-5                       # nn.BatchNorm1d default eps
_LANE = 128
_SUBLANE = 8

# TODO(synk): running_mean/running_var buffer updates (momentum) are not
# emulated; they do not affect the training-mode forward output.


def _round_up(x, m):
    return ((x + m - 1) // m) * m


def _cdiv(a, b):
    return -(-a // b)


def _vmem_budgets():
    """(scoped vmem limit, block budget) derived from the chip's physical VMEM."""
    phys = None
    try:
        phys = getattr(pltpu.get_tpu_info(), "vmem_capacity_bytes", None)
    except Exception:
        phys = None
    if phys is None:
        phys = 64 * 1024 * 1024                  # conservative (v7x-sized)
    if phys >= 128 * 1024 * 1024:                # v5e / v6e
        return 96 * 1024 * 1024, 48 * 1024 * 1024
    return 48 * 1024 * 1024, 24 * 1024 * 1024    # v7x-class (64 MiB physical)


def _pick_tile_f(F128, tile_f_max, want_tiles):
    """Largest lane-multiple divisor of F128 that fits the budget and (if
    possible) leaves at least `want_tiles` parallel F-tiles."""
    f_units = F128 // _LANE
    candidates = [u * _LANE for u in range(1, f_units + 1) if f_units % u == 0]
    for min_tiles in (want_tiles, 1):
        feasible = [t for t in candidates
                    if t <= tile_f_max and (F128 // t) >= min_tiles]
        if feasible:
            return max(feasible)
    return _LANE


def _clamp_tile_r(tile_r, R, min_tiles=1):
    tile_r = max(_SUBLANE, (tile_r // _SUBLANE) * _SUBLANE)
    tile_r = min(tile_r, _round_up(R, _SUBLANE))
    while min_tiles > 1 and _cdiv(R, tile_r) < min_tiles and tile_r > _SUBLANE:
        tile_r = max(_SUBLANE, _round_up(tile_r // 2, _SUBLANE))
    return tile_r


# ---------------------------------------------------------------------------
# One-pass kernel: full sample axis resident per channel tile.
# Streaming sum / sum-of-squares: x_ref is read directly in each expression so
# no full-block f32 temporary needs to stay live (extra VMEM re-reads are free;
# the kernel is HBM-bound).
# ---------------------------------------------------------------------------
def bn_fused_kernel(x_ref, gamma_ref, beta_ref, o_ref, *, n_rows):
    inv_n = 1.0 / n_rows
    s = jnp.sum(x_ref[...].astype(jnp.float32), axis=0, keepdims=True)
    ssq = jnp.sum(jnp.square(x_ref[...].astype(jnp.float32)), axis=0,
                  keepdims=True)
    mean = s * inv_n
    var = jnp.maximum(ssq * inv_n - mean * mean, 0.0)   # biased (training mode)
    scale = jax.lax.rsqrt(var + EPS) * gamma_ref[...]   # fold gamma into scale
    shift = beta_ref[...] - mean * scale
    o_ref[...] = (x_ref[...].astype(jnp.float32) * scale + shift
                  ).astype(o_ref.dtype)


# ---------------------------------------------------------------------------
# Two-pass kernels: fully parallel partial-stats pass, then apply pass.
# ---------------------------------------------------------------------------
def bn_partial_stats_kernel(x_ref, sum_ref, ssq_ref, *, n_rows, tile_r, ragged):
    x = x_ref[...].astype(jnp.float32)                  # (tile_r, tile_f)
    if ragged:                                          # mask rows beyond R
        row0 = pl.program_id(0) * tile_r
        rows = row0 + jax.lax.broadcasted_iota(jnp.int32, x.shape, 0)
        x = jnp.where(rows < n_rows, x, 0.0)
    sum_ref[...] = jnp.sum(x, axis=0, keepdims=True)[None]      # (1,1,tile_f)
    ssq_ref[...] = jnp.sum(x * x, axis=0, keepdims=True)[None]


def bn_apply_kernel(x_ref, scale_ref, shift_ref, o_ref):
    o_ref[...] = (x_ref[...].astype(jnp.float32) * scale_ref[...]
                  + shift_ref[...]).astype(o_ref.dtype)


# ---------------------------------------------------------------------------
# Wrappers
# ---------------------------------------------------------------------------
def _run_one_pass(x2, g2, b2, R, F128, tile_f, out_dtype, itemsize, vmem_limit):
    n_ftiles = F128 // tile_f
    return pl.pallas_call(
        functools.partial(bn_fused_kernel, n_rows=R),
        out_shape=jax.ShapeDtypeStruct((R, F128), out_dtype),
        grid_spec=pltpu.PrefetchScalarGridSpec(
            num_scalar_prefetch=0,
            grid=(n_ftiles,),
            in_specs=[
                pl.BlockSpec((R, tile_f), lambda j: (0, j)),
                pl.BlockSpec((1, tile_f), lambda j: (0, j)),
                pl.BlockSpec((1, tile_f), lambda j: (0, j)),
            ],
            out_specs=pl.BlockSpec((R, tile_f), lambda j: (0, j)),
        ),
        compiler_params=pltpu.CompilerParams(
            dimension_semantics=("parallel",),
            vmem_limit_bytes=vmem_limit,
        ),
        cost_estimate=pl.CostEstimate(
            flops=6 * R * F128, transcendentals=F128,
            bytes_accessed=2 * R * F128 * itemsize),
    )(x2, g2, b2)


def _run_two_pass(x2, g2, b2, R, F128, out_dtype, itemsize, vmem_limit,
                  block_budget):
    tile_f = _pick_tile_f(F128, 512, want_tiles=2)
    n_ftiles = F128 // tile_f

    # ---- Pass 1: partial sums / sums of squares, fully parallel grid. ----
    # Only the input block is double-buffered (+ one f32 allowance for the
    # converted/masked block), so row tiles can be large.
    bytes_per_row_s = tile_f * (2 * itemsize + 4)
    tile_r_s = _clamp_tile_r(block_budget // bytes_per_row_s, R,
                             min_tiles=2 if n_ftiles == 1 else 1)
    n_rtiles_s = _cdiv(R, tile_r_s)
    ragged = (R % tile_r_s) != 0

    psum, pssq = pl.pallas_call(
        functools.partial(bn_partial_stats_kernel, n_rows=R, tile_r=tile_r_s,
                          ragged=ragged),
        out_shape=(jax.ShapeDtypeStruct((n_rtiles_s, 1, F128), jnp.float32),
                   jax.ShapeDtypeStruct((n_rtiles_s, 1, F128), jnp.float32)),
        grid_spec=pltpu.PrefetchScalarGridSpec(
            num_scalar_prefetch=0,
            grid=(n_rtiles_s, n_ftiles),
            in_specs=[pl.BlockSpec((tile_r_s, tile_f), lambda r, j: (r, j))],
            out_specs=(pl.BlockSpec((1, 1, tile_f), lambda r, j: (r, 0, j)),
                       pl.BlockSpec((1, 1, tile_f), lambda r, j: (r, 0, j))),
        ),
        compiler_params=pltpu.CompilerParams(
            dimension_semantics=("parallel", "parallel"),
            vmem_limit_bytes=vmem_limit,
        ),
        cost_estimate=pl.CostEstimate(
            flops=3 * R * F128, transcendentals=0,
            bytes_accessed=R * F128 * itemsize),
    )(x2)

    # Tiny F-sized combine + fold gamma/beta into scale/shift (plain XLA).
    s = jnp.sum(psum, axis=(0, 1))
    ssq = jnp.sum(pssq, axis=(0, 1))
    inv_n = 1.0 / R
    mean = s * inv_n
    var = jnp.maximum(ssq * inv_n - mean * mean, 0.0)
    scale = jax.lax.rsqrt(var + EPS) * g2[0]
    shift = b2[0] - mean * scale
    scale2 = scale.reshape(1, F128)
    shift2 = shift.reshape(1, F128)

    # ---- Pass 2: y = x*scale + shift, fully parallel, lane-dense stores. ----
    bytes_per_row_a = tile_f * (4 * itemsize + 4)
    tile_r_a = _clamp_tile_r(block_budget // bytes_per_row_a, R,
                             min_tiles=2 if n_ftiles == 1 else 1)
    n_rtiles_a = _cdiv(R, tile_r_a)

    return pl.pallas_call(
        bn_apply_kernel,
        out_shape=jax.ShapeDtypeStruct((R, F128), out_dtype),
        grid_spec=pltpu.PrefetchScalarGridSpec(
            num_scalar_prefetch=0,
            grid=(n_rtiles_a, n_ftiles),
            in_specs=[
                pl.BlockSpec((tile_r_a, tile_f), lambda r, j: (r, j)),
                pl.BlockSpec((1, tile_f), lambda r, j: (0, j)),
                pl.BlockSpec((1, tile_f), lambda r, j: (0, j)),
            ],
            out_specs=pl.BlockSpec((tile_r_a, tile_f), lambda r, j: (r, j)),
        ),
        compiler_params=pltpu.CompilerParams(
            dimension_semantics=("parallel", "parallel"),
            vmem_limit_bytes=vmem_limit,
        ),
        cost_estimate=pl.CostEstimate(
            flops=2 * R * F128, transcendentals=0,
            bytes_accessed=2 * R * F128 * itemsize),
    )(x2, scale2, shift2)


def non_rotation_invariant_descriptor(x, gamma, beta, *, force_two_pass=False):
    """x: (B, T, N, C); gamma, beta: (N*C,). Returns (B, T, N, C)."""
    B, T, N, C = x.shape
    F = N * C
    R = B * T
    itemsize = jnp.dtype(x.dtype).itemsize
    vmem_limit, block_budget = _vmem_budgets()

    # (B,T,N,C) -> (B*T, N*C) is a pure flat view of the PyTorch channel layout.
    x2 = x.reshape(R, F)
    F128 = _round_up(F, _LANE)
    if F128 != F:
        # Rare: channel axis not lane-aligned; pad F only (never pad R).
        x2 = jnp.pad(x2, ((0, 0), (0, F128 - F)))
    g2 = jnp.pad(gamma.astype(jnp.float32), (0, F128 - F),
                 constant_values=1.0).reshape(1, F128)
    b2 = jnp.pad(beta.astype(jnp.float32), (0, F128 - F)).reshape(1, F128)

    # One-pass viability: double-buffered in + out blocks of shape (R, tile_f)
    # (+ one f32 allowance for sub-f32 inputs) must fit the block budget with
    # at least a 128-lane tile.  x then crosses HBM only twice.
    per_elem = 4 * itemsize + (4 if itemsize < 4 else 0)
    onepass_tile_f_max = (block_budget // (max(R, 1) * per_elem)) // _LANE * _LANE
    use_one_pass = (not force_two_pass) and onepass_tile_f_max >= _LANE

    if use_one_pass:
        tile_f = _pick_tile_f(F128, min(onepass_tile_f_max, 1024), want_tiles=2)
        out2 = _run_one_pass(x2, g2, b2, R, F128, tile_f, x.dtype, itemsize,
                             vmem_limit)
    else:
        out2 = _run_two_pass(x2, g2, b2, R, F128, x.dtype, itemsize,
                             vmem_limit, block_budget)

    if F128 != F:
        out2 = out2[:, :F]
    return out2.reshape(B, T, N, C)


def _reference(x, gamma, beta):
    # Pure-JAX reference of training-mode BatchNorm1d over channels N*C.
    B, T, N, C = x.shape
    x2 = x.reshape(B * T, N * C).astype(jnp.float32)
    mean = jnp.mean(x2, axis=0, keepdims=True)
    var = jnp.mean((x2 - mean) ** 2, axis=0, keepdims=True)
    y = (x2 - mean) / jnp.sqrt(var + EPS) * gamma[None, :] + beta[None, :]
    return y.reshape(B, T, N, C).astype(x.dtype)


if __name__ == "__main__":
    key = jax.random.PRNGKey(0)

    def _case(key, B, T, N, C, force_two_pass):
        kx, kg, kb = jax.random.split(key, 3)
        x = jax.random.normal(kx, (B, T, N, C), dtype=jnp.float32)
        gamma = 1.0 + 0.1 * jax.random.normal(kg, (N * C,), dtype=jnp.float32)
        beta = 0.1 * jax.random.normal(kb, (N * C,), dtype=jnp.float32)
        out = jax.block_until_ready(
            non_rotation_invariant_descriptor(
                x, gamma, beta, force_two_pass=force_two_pass))
        ref = _reference(x, gamma, beta)
        assert out.shape == (B, T, N, C)
        assert jnp.allclose(out, ref, atol=1e-4, rtol=1e-4), \
            f"mismatch: max abs err {jnp.max(jnp.abs(out - ref))}"

    k1, k2, k3, k4 = jax.random.split(key, 4)
    # Default (one-pass) path: F = N*C = 128, R = B*T = 16.
    _case(k1, 2, 8, 16, 8, force_two_pass=False)
    # Two-pass path on the same shape (exercises partial-stats + apply).
    _case(k2, 2, 8, 16, 8, force_two_pass=True)
    # Non-lane-aligned channel count (F = 60 -> padded to 128, then sliced).
    _case(k3, 2, 8, 10, 6, force_two_pass=False)
    # Ragged sample axis (R = 15) through the masked two-pass path.
    _case(k4, 3, 5, 16, 8, force_two_pass=True)

    print("KERNEL_OK")
</pallas_src>

<mosaic_0001>
module attributes {stable_mosaic.version = 11 : i64} {
  func.func @bn_fused_kernel(%arg0: i32, %arg1: memref<16x128xf32, #tpu.memory_space<vmem>>, %arg2: memref<1x128xf32, #tpu.memory_space<vmem>>, %arg3: memref<1x128xf32, #tpu.memory_space<vmem>>, %arg4: memref<16x128xf32, #tpu.memory_space<vmem>>) attributes {dimension_semantics = [#tpu.dimension_semantics<parallel>], iteration_bounds = array<i64: 1>, scalar_prefetch = 0 : i64, scratch_operands = 0 : i64, tpu.core_type = #tpu.core_type<tc>, window_params = [{transform_indices = @transform_0, window_bounds = array<i64: 16, 128>}, {transform_indices = @transform_1, window_bounds = array<i64: 1, 128>}, {transform_indices = @transform_2, window_bounds = array<i64: 1, 128>}, {transform_indices = @transform_3, window_bounds = array<i64: 16, 128>}]} {
    %c0 = arith.constant 0 : index
    %c0_0 = arith.constant 0 : index
    %0 = vector.load %arg1[%c0, %c0_0] : memref<16x128xf32, #tpu.memory_space<vmem>>, vector<16x128xf32>
    %cst = arith.constant dense<0.000000e+00> : vector<128xf32>
    %1 = vector.multi_reduction <add>, %0, %cst [0] : vector<16x128xf32> to vector<128xf32>
    %2 = vector.shape_cast %1 : vector<128xf32> to vector<1x128xf32>
    %c0_1 = arith.constant 0 : index
    %c0_2 = arith.constant 0 : index
    %3 = vector.load %arg1[%c0_1, %c0_2] : memref<16x128xf32, #tpu.memory_space<vmem>>, vector<16x128xf32>
    %4 = arith.mulf %3, %3 : vector<16x128xf32>
    %cst_3 = arith.constant dense<0.000000e+00> : vector<128xf32>
    %5 = vector.multi_reduction <add>, %4, %cst_3 [0] : vector<16x128xf32> to vector<128xf32>
    %6 = vector.shape_cast %5 : vector<128xf32> to vector<1x128xf32>
    %cst_4 = arith.constant 6.250000e-02 : f32
    %7 = vector.broadcast %cst_4 : f32 to vector<1x128xf32>
    %8 = arith.mulf %2, %7 : vector<1x128xf32>
    %cst_5 = arith.constant 6.250000e-02 : f32
    %9 = vector.broadcast %cst_5 : f32 to vector<1x128xf32>
    %10 = arith.mulf %6, %9 : vector<1x128xf32>
    %11 = arith.mulf %8, %8 : vector<1x128xf32>
    %12 = arith.subf %10, %11 : vector<1x128xf32>
    %cst_6 = arith.constant 0.000000e+00 : f32
    %13 = vector.broadcast %cst_6 : f32 to vector<1x128xf32>
    %14 = arith.maximumf %12, %13 : vector<1x128xf32>
    %cst_7 = arith.constant 9.99999974E-6 : f32
    %15 = vector.broadcast %cst_7 : f32 to vector<1x128xf32>
    %16 = arith.addf %14, %15 : vector<1x128xf32>
    %17 = math.rsqrt %16 : vector<1x128xf32>
    %c0_8 = arith.constant 0 : index
    %c0_9 = arith.constant 0 : index
    %18 = vector.load %arg2[%c0_8, %c0_9] : memref<1x128xf32, #tpu.memory_space<vmem>>, vector<1x128xf32>
    %19 = arith.mulf %17, %18 : vector<1x128xf32>
    %c0_10 = arith.constant 0 : index
    %c0_11 = arith.constant 0 : index
    %20 = vector.load %arg3[%c0_10, %c0_11] : memref<1x128xf32, #tpu.memory_space<vmem>>, vector<1x128xf32>
    %21 = arith.mulf %8, %19 : vector<1x128xf32>
    %22 = arith.subf %20, %21 : vector<1x128xf32>
    %c0_12 = arith.constant 0 : index
    %c0_13 = arith.constant 0 : index
    %23 = vector.load %arg1[%c0_12, %c0_13] : memref<16x128xf32, #tpu.memory_space<vmem>>, vector<16x128xf32>
    %24 = vector.broadcast %19 : vector<1x128xf32> to vector<16x128xf32>
    %25 = arith.mulf %23, %24 : vector<16x128xf32>
    %26 = vector.broadcast %22 : vector<1x128xf32> to vector<16x128xf32>
    %27 = arith.addf %25, %26 : vector<16x128xf32>
    %c0_14 = arith.constant 0 : index
    %c0_15 = arith.constant 0 : index
    %28 = vector.load %arg4[%c0_14, %c0_15] : memref<16x128xf32, #tpu.memory_space<vmem>>, vector<16x128xf32>
    tpu.vector_store %arg4[%c0_14, %c0_15], %27 {strides = array<i32>} : memref<16x128xf32, #tpu.memory_space<vmem>>, vector<16x128xf32>,
    return
  }
  func.func @transform_0(%arg0: i32) -> (i32, i32) {
    %c0_i32 = arith.constant 0 : i32
    %c0_i32_0 = arith.constant 0 : i32
    return %c0_i32, %arg0 : i32, i32
  }
  func.func @transform_1(%arg0: i32) -> (i32, i32) {
    %c0_i32 = arith.constant 0 : i32
    %c0_i32_0 = arith.constant 0 : i32
    return %c0_i32, %arg0 : i32, i32
  }
  func.func @transform_2(%arg0: i32) -> (i32, i32) {
    %c0_i32 = arith.constant 0 : i32
    %c0_i32_0 = arith.constant 0 : i32
    return %c0_i32, %arg0 : i32, i32
  }
  func.func @transform_3(%arg0: i32) -> (i32, i32) {
    %c0_i32 = arith.constant 0 : i32
    %c0_i32_0 = arith.constant 0 : i32
    return %c0_i32, %arg0 : i32, i32
  }
}

</mosaic_0001>

<llo_original>
// kernel: tpu_custom_call.1
$region0: #{tpu_custom_call.1}
  #allocation0 [shape = 'u32[]', space=smem, size = 0x4, offset = 0x4, fixed_abs, tag = 'smem constant byte address 0x4 - core index']
  #allocation1 [shape = 'u32[72,128]{1,0:T(1,128)}', space=vmem, size = 0x9000, scoped, tag = 'internal scratch']
  %s0 = inlined_call_operand.hbm [shape: f32[16,128], index: 0, kind: input, shape index: {}]
  %s1 = inlined_call_operand.hbm [shape: f32[1,128], index: 1, kind: input, shape index: {}]
  %s2 = inlined_call_operand.vmem [shape: f32[1,128], index: 2, kind: input, shape index: {}]
  %s3 = inlined_call_operand.hbm [shape: f32[16,128], index: 3, kind: output, shape index: {}]
  %s4 = sld [smem:[#allocation0]]
  $region30: #{tpu_custom_call.1} parent=0
    _
  %s6 = ssub.s32 1, %s4
  %s7 = scalar_select 0, %s6, %s4
  $region1: #{tpu_custom_call.1} parent=0
    #allocation2 [shape = 'u8[8192]{0}', space=vmem, size = 0x2000, scoped, tag = 'input window, operand 0, single buffered']
    #allocation3 [shape = 's32[1]{0}', space=sflag, size = 0x4, scoped, tag = 'scoped memory for tpu_custom_call.1']
    #allocation4 [shape = 's32[1]{0}', space=sflag, size = 0x4, scoped, tag = 'scoped memory for tpu_custom_call.1']
    #allocation5 [shape = 'u8[512]{0}', space=vmem, size = 0x400, scoped, tag = 'input window, operand 1, single buffered']
    #allocation6 [shape = 's32[1]{0}', space=sflag, size = 0x4, scoped, tag = 'scoped memory for tpu_custom_call.1']
    #allocation7 [shape = 'u8[8192]{0}', space=vmem, size = 0x2000, scoped, tag = 'output window, operand 0, single buffered']
    %8 = vsyncpa [#allocation3], 0
    %9 = vsyncpa [#allocation6], 0
    %10 = vsyncpa [#allocation4], 0
    // Predicated region
    $region2: #{tpu_custom_call.1} parent=1 // pred_check
      _
    $region3: #{tpu_custom_call.1} parent=1 // pred_check_branch
      %12 = sbr.rel (0) target = $region5
    $region4: #{tpu_custom_call.1} parent=1 // pred_region
      %14 = vsyncadd [#allocation3], 0
      %s15 = sshll.u32 %s0, 4
      %s16 = int_to_ptr.hbm [resolvable:$true] %s15
      %s17 = sshll.u32 [#allocation2], 4
      %s18 = int_to_ptr.vmem [resolvable:$true] %s17
      %23 = dma.hbm_to_vmem [thread:$0]  %s16, 256, %s18, [#allocation3], 128, 128, 8
    $region5: #{tpu_custom_call.1} parent=1 // pred_fallthru
      _
    // Predicated region
    $region6: #{tpu_custom_call.1} parent=1 // pred_check
      _
    $region7: #{tpu_custom_call.1} parent=1 // pred_check_branch
      %25 = sbr.rel (0) target = $region9
    $region8: #{tpu_custom_call.1} parent=1 // pred_region
      %27 = vsyncadd [#allocation6], 0
      %s29 = sshll.u32 %s1, 4
      %s30 = int_to_ptr.hbm [resolvable:$true] %s29
      %s31 = sshll.u32 [#allocation5], 4
      %s32 = int_to_ptr.vmem [resolvable:$true] %s31
      %34 = dma.hbm_to_vmem [thread:$0]  %s30, 16, %s32, [#allocation6]
    $region9: #{tpu_custom_call.1} parent=1 // pred_fallthru
      _
    // Predicated region
    $region10: #{tpu_custom_call.1} parent=1 // pred_check
      _
    $region11: #{tpu_custom_call.1} parent=1 // pred_check_branch
      %36 = sbr.rel (0) target = $region13
    $region12: #{tpu_custom_call.1} parent=1 // pred_region
      _
    $region13: #{tpu_custom_call.1} parent=1 // pred_fallthru
      _
    // Predicated region
    $region14: #{tpu_custom_call.1} parent=1 // pred_check
      _
    $region15: #{tpu_custom_call.1} parent=1 // pred_check_branch
      %38 = sbr.rel (0) target = $region17
    $region16: #{tpu_custom_call.1} parent=1 // pred_region
      %40 = dma.done [#allocation3], 256
    $region17: #{tpu_custom_call.1} parent=1 // pred_fallthru
      _
    // Predicated region
    $region18: #{tpu_custom_call.1} parent=1 // pred_check
      _
    $region19: #{tpu_custom_call.1} parent=1 // pred_check_branch
      %42 = sbr.rel (0) target = $region21
    $region20: #{tpu_custom_call.1} parent=1 // pred_region
      %44 = dma.done [#allocation6], 16
    $region21: #{tpu_custom_call.1} parent=1 // pred_fallthru
      _
    %v45 = vld [vmem:[#allocation2] sm:$0xff]
    %v46 = vld [vmem:[#allocation2 + $0x8] sm:$0xff]
    %v47 = vadd.f32 %v45, %v46
    %v48 = vrot.slane %v47, 4
    %v49 = vadd.f32 %v47, %v48
    %v50 = vrot.slane %v49, 2
    %v51 = vadd.f32 %v49, %v50
    %v52 = vrot.slane %v51, 1
    %v53 = vadd.f32 %v51, %v52
    %v54 = vmul.f32 %v45, %v45
    %v55 = vmul.f32 %v46, %v46
    %v56 = vadd.f32 %v54, %v55
    %v57 = vrot.slane %v56, 4
    %v58 = vadd.f32 %v56, %v57
    %v59 = vrot.slane %v58, 2
    %v60 = vadd.f32 %v58, %v59
    %v61 = vrot.slane %v60, 1
    %v62 = vadd.f32 %v60, %v61
    %v63 = vmul.f32 %v53, 0.0625
    %v64 = vmul.f32 %v62, 0.0625
    %v65 = vmul.f32 %v63, %v63
    %v66 = vsub.f32 %v64, %v65
    %v67 = vmax.f32 %v66, 0.0
    %v68 = vadd.f32 %v67, 1e-05
    %v69 = vrsqrt.pop %v68
    %v70 = vmul.f32 %v69, %v68
    %v71 = vmul.f32 %v70, %v69
    %v72 = vmul.f32 0.5, %v71
    %v73 = vsub.f32 1.5, %v72
    %v74 = vmul.f32 %v69, %v73
    %vm75 = vweird.f32 %v68
    %vm76 = vweird.f32 %v69
    %vm77 = vmor %vm75, %vm76
    %v78 = vsel %vm77, %v69, %v74
    %v79 = vld [vmem:[#allocation5] sm:$0x1]
    %v80 = vmul.f32 %v78, %v79
    %v81 = vld [vmem:[%s2] sm:$0x1]
    %v82 = vmul.f32 %v63, %v80
    %v83 = vsub.f32 %v81, %v82
    %v84 = vperm.slane %v80, 0
    %v85 = vmul.f32 %v45, %v84
    %v86 = vmul.f32 %v46, %v84
    %v88 = vperm.slane %v83, 0
    %v90 = vadd.f32 %v85, %v88
    %v91 = vadd.f32 %v86, %v88
    %92 = vst [vmem:[#allocation7] sm:$0xff] %v90
    %93 = vst [vmem:[#allocation7 + $0x8] sm:$0xff] %v91
    // Predicated region
    $region22: #{tpu_custom_call.1} parent=1 // pred_check
      _
    $region23: #{tpu_custom_call.1} parent=1 // pred_check_branch
      %95 = sbr.rel (0) target = $region25
    $region24: #{tpu_custom_call.1} parent=1 // pred_region
      %97 = vsyncadd [#allocation4], 0
      %s98 = sshll.u32 [#allocation7], 4
      %s99 = int_to_ptr.vmem [resolvable:$true] %s98
      %s100 = sshll.u32 %s3, 4
      %s101 = int_to_ptr.hbm [resolvable:$true] %s100
      %106 = dma.vmem_to_hbm [thread:$0]  %s99, 256, %s101, [#allocation4], 128, 128, 8
    $region25: #{tpu_custom_call.1} parent=1 // pred_fallthru
      _
    // Predicated region
    $region26: #{tpu_custom_call.1} parent=1 // pred_check
      _
    $region27: #{tpu_custom_call.1} parent=1 // pred_check_branch
      %108 = sbr.rel (0) target = $region29
    $region28: #{tpu_custom_call.1} parent=1 // pred_region
      %110 = dma.done [#allocation4], 256
    $region29: #{tpu_custom_call.1} parent=1 // pred_fallthru
      _
    %111 = vsyncpa [#allocation3], 1
    %112 = vsyncpa [#allocation6], 1
    %113 = vsyncpa [#allocation4], 1

</llo_original>
